<compile_context>
chip_gen: v7x
topology: tpu7x:2x2x1
jax: 0.10.0
libtpu: 0.0.40
codegen_flags: <defaults>
</compile_context>

<pallas_src>
import functools

import jax
import jax.numpy as jnp
from jax import lax
from jax.experimental import pallas as pl
from jax.experimental.pallas import tpu as pltpu

# ----- problem sizes (small, synthetic) --------------------------------------
N_M, N_U, N_HID, N_DIM = 16, 24, 32, 5          # items, users, hidden, rbf dim
GK_SIZE = 3                                      # global conv kernel size
DOT_SCALE = 1.0
LAMBDA_S = 0.006                                 # sparse-kernel reg weight
LAMBDA_2 = 20.0                                  # l2 reg weight
LEAKY_SLOPE = 0.01                               # nn.LeakyReLU() default

# ----- packed parameter-slab layout (lane 0 start, 8-sublane-aligned rows) ----
LANES = 128
ROW_W1 = 0                                   # (128,128): rows<n_u , lanes<n_hid = W1*w_hat1
ROW_W2 = 128                                 # (128,128): rows<n_hid, lanes<n_u  = W2*w_hat2
ROW_CK = 256                                 # (n_m,128):            lanes<9     = ck*dot_scale
ROW_B1 = ROW_CK + ((N_M + 7) // 8) * 8       # 272: b1 in lanes<n_hid
ROW_B2 = ROW_B1 + 8                          # 280: b2 in lanes<n_u
P_ROWS = ROW_B2 + 8                          # 288 rows total (~144 KiB)


# ----- fused Pallas kernel: per-sample GLocal_K forward -----------------------
def _glocal_k_kernel(x_ref, p_ref, o_ref, *, n_m, n_u):
    f32 = jnp.float32

    # parameter tiles (static, 8-sublane-aligned slices at lane offset 0)
    w1 = p_ref[ROW_W1:ROW_W1 + LANES, :]         # (128,128), rows >= n_u  are zero
    w2 = p_ref[ROW_W2:ROW_W2 + LANES, :]         # (128,128), rows >= n_hid are zero
    ck = p_ref[ROW_CK:ROW_CK + n_m, :]           # (n_m,128), lanes >= 9 zero, dot_scale folded in
    b1 = p_ref[ROW_B1:ROW_B1 + 1, :]             # (1,128)
    b2 = p_ref[ROW_B2:ROW_B2 + 1, :]             # (1,128)

    def local_kernel_net(z):
        # zero-padded weight rows / bias lanes keep every padded lane exact
        h = jnp.dot(z, w1, preferred_element_type=f32) + b1
        h = jax.nn.sigmoid(h)
        return jnp.dot(h, w2, preferred_element_type=f32) + b2

    x = x_ref[...]                               # (n_m,128), lanes >= n_u are zero

    # --- 1st local pass: x_local = kernel_net(x) ------------------------------
    x_local = local_kernel_net(x)                # lanes >= n_u exactly zero

    # --- global kernel: gk = mean_over_users(x_local) @ (conv_kernel*scale) ---
    avg = jnp.sum(x_local, axis=1, keepdims=True) * (1.0 / n_u)   # (n_m,1)
    gk = jnp.sum(avg * ck, axis=0, keepdims=True)                 # (1,128), lanes<9 valid

    # --- 3x3 "same" conv on the ORIGINAL x: rolls (XLU) + 9 tap FMAs (VPU) ----
    # column (lane) shifts: circular wraparound lands in the zero lane padding
    xl = pltpu.roll(x, shift=1, axis=1)          # xl[:, j] = x[:, j-1]
    xr = pltpu.roll(x, shift=LANES - 1, axis=1)  # xr[:, j] = x[:, j+1]

    t = [gk[0:1, k:k + 1] for k in range(GK_SIZE * GK_SIZE)]      # (1,1) taps
    c0 = t[0] * xl + t[1] * x + t[2] * xr        # kernel row di = 0
    c1 = t[3] * xl + t[4] * x + t[5] * xr        # kernel row di = 1
    c2 = t[6] * xl + t[7] * x + t[8] * xr        # kernel row di = 2

    # row (sublane) shifts: circular roll + zero the wrapped boundary row
    ri = lax.broadcasted_iota(jnp.int32, x.shape, 0)
    c0d = jnp.where(ri == 0, 0.0, pltpu.roll(c0, shift=1, axis=0))            # out[i] += c0[i-1]
    c2u = jnp.where(ri == n_m - 1, 0.0, pltpu.roll(c2, shift=n_m - 1, axis=0))  # out[i] += c2[i+1]
    acc = c0d + c1 + c2u
    xc = jnp.where(acc >= 0.0, acc, LEAKY_SLOPE * acc)            # LeakyReLU(0.01)

    # --- 2nd local pass -> single lane-dense output ----------------------------
    o_ref[...] = local_kernel_net(xc)


# ----- one-time parameter preprocessing + packing ------------------------------
def pack_params(params, conv_kernel, dot_scale=DOT_SCALE):
    """RBF w_hat, effective weights W*w_hat, reg loss and dot_scale folding are
    parameter-only; compute them once and pack everything into one (P_ROWS,128) slab."""
    n_u, n_hid = params["W1"].shape
    n_m, gk2 = conv_kernel.shape

    def w_hat_of(u, vt):                         # max(0, 1 - ||u_i - v_j||^2)
        d = u[:, None, :] - jnp.transpose(vt)[None, :, :]
        return jnp.maximum(1.0 - jnp.sum(d * d, axis=-1), 0.0)

    w_hat1 = w_hat_of(params["u1"], params["v1t"])     # (n_u, n_hid)
    w_hat2 = w_hat_of(params["u2"], params["v2t"])     # (n_hid, n_u)
    w_eff1 = params["W1"] * w_hat1
    w_eff2 = params["W2"] * w_hat2
    reg = (LAMBDA_S * jnp.mean(w_hat1 * w_hat1) + LAMBDA_2 * jnp.mean(params["W1"] ** 2)
           + LAMBDA_S * jnp.mean(w_hat2 * w_hat2) + LAMBDA_2 * jnp.mean(params["W2"] ** 2))

    assert n_u <= LANES and n_hid <= LANES and gk2 <= LANES
    assert n_m <= ROW_B1 - ROW_CK
    slab = jnp.zeros((P_ROWS, LANES), jnp.float32)
    slab = slab.at[ROW_W1:ROW_W1 + n_u, :n_hid].set(w_eff1)
    slab = slab.at[ROW_W2:ROW_W2 + n_hid, :n_u].set(w_eff2)
    slab = slab.at[ROW_CK:ROW_CK + n_m, :gk2].set(conv_kernel * dot_scale)
    slab = slab.at[ROW_B1, :n_hid].set(params["b1"][0])
    slab = slab.at[ROW_B2, :n_u].set(params["b2"][0])
    return slab, reg


# ----- wrapper ------------------------------------------------------------------
def glocal_k_forward(x, param_slab, reg):
    single = x.ndim == 2
    if single:
        x = x[None]
    b, n_m, n_u = x.shape
    assert n_u <= LANES and n_m <= ROW_B1 - ROW_CK

    # lane-dense per-sample slab: x in lanes [0, n_u), zeros elsewhere
    x_slab = jnp.zeros((b, n_m, LANES), jnp.float32).at[:, :, :n_u].set(x)

    kern = functools.partial(_glocal_k_kernel, n_m=n_m, n_u=n_u)
    out = pl.pallas_call(
        kern,
        out_shape=jax.ShapeDtypeStruct((b, n_m, LANES), jnp.float32),
        grid=(b,),
        in_specs=[
            pl.BlockSpec((None, n_m, LANES), lambda i: (i, 0, 0)),   # per-sample x slab
            pl.BlockSpec((P_ROWS, LANES), lambda i: (0, 0)),         # resident parameter slab
        ],
        out_specs=pl.BlockSpec((None, n_m, LANES), lambda i: (i, 0, 0)),
        compiler_params=pltpu.CompilerParams(dimension_semantics=("parallel",)),
    )(x_slab, param_slab)

    y = out[:, :, :n_u]
    if single:
        y = y[0]
    return y, reg


# ----- pure-JAX reference of the same forward (structural check) -----------------
def _reference_forward(x, params, conv_kernel, dot_scale=DOT_SCALE):
    hi = lax.Precision.HIGHEST

    def w_hat_of(u, vt):
        d = u[:, None, :] - jnp.transpose(vt)[None, :, :]
        return jnp.maximum(1.0 - jnp.sum(d * d, axis=-1), 0.0)

    def layer(xin, W, u, vt, b, use_sigmoid):
        wh = w_hat_of(u, vt)
        y = jnp.dot(xin, W * wh, precision=hi) + b
        if use_sigmoid:
            y = jax.nn.sigmoid(y)
        reg = LAMBDA_S * jnp.mean(wh * wh) + LAMBDA_2 * jnp.mean(W * W)
        return y, reg

    def knet(xin):
        h, r1 = layer(xin, params["W1"], params["u1"], params["v1t"], params["b1"], True)
        y, r2 = layer(h, params["W2"], params["u2"], params["v2t"], params["b2"], False)
        return y, r1 + r2

    x_local, _ = knet(x)
    avg = jnp.mean(x_local, axis=1)[None, :]                       # (1, n_m)
    gk = jnp.dot(avg, conv_kernel, precision=hi) * dot_scale       # (1, 9)
    W = gk.reshape(GK_SIZE, GK_SIZE)
    n_m, n_u = x.shape
    xp = jnp.pad(x, ((1, 1), (1, 1)))
    conv = jnp.zeros((n_m, n_u), jnp.float32)
    for di in range(GK_SIZE):
        for dj in range(GK_SIZE):
            conv = conv + W[di, dj] * xp[di:di + n_m, dj:dj + n_u]
    xc = jnp.where(conv >= 0.0, conv, LEAKY_SLOPE * conv)
    y, reg = knet(xc)
    return y, reg


# ----- deterministic parameter init -----------------------------------------------
def init_params(key):
    ks = jax.random.split(key, 9)
    params = {
        "W1":  jax.random.normal(ks[0], (N_U, N_HID), jnp.float32) * 0.1,
        "u1":  jax.random.normal(ks[1], (N_U, N_DIM), jnp.float32) * 1e-3,
        "v1t": jax.random.normal(ks[2], (N_DIM, N_HID), jnp.float32) * 1e-3,   # v1 stored transposed
        "b1":  jax.random.normal(ks[3], (1, N_HID), jnp.float32) * 0.01,
        "W2":  jax.random.normal(ks[4], (N_HID, N_U), jnp.float32) * 0.1,
        "u2":  jax.random.normal(ks[5], (N_HID, N_DIM), jnp.float32) * 1e-3,
        "v2t": jax.random.normal(ks[6], (N_DIM, N_U), jnp.float32) * 1e-3,     # v2 stored transposed
        "b2":  jax.random.normal(ks[7], (1, N_U), jnp.float32) * 0.01,
    }
    # conv_kernel: (n_m, gk_size**2), xavier_uniform with gain = calc_gain('relu')
    gain = jnp.sqrt(2.0)
    limit = gain * jnp.sqrt(6.0 / (N_M + GK_SIZE * GK_SIZE))
    conv_kernel = jax.random.uniform(ks[8], (N_M, GK_SIZE * GK_SIZE),
                                     jnp.float32, minval=-limit, maxval=limit)
    return params, conv_kernel


if __name__ == "__main__":
    key = jax.random.PRNGKey(0)
    kp, kx = jax.random.split(key)
    params, conv_kernel = init_params(kp)
    param_slab, reg_const = pack_params(params, conv_kernel, DOT_SCALE)

    fwd = jax.jit(glocal_k_forward)
    ref = jax.jit(_reference_forward)

    # --- single rating matrix (module-faithful path) ---------------------------
    x = jax.random.uniform(kx, (N_M, N_U), jnp.float32, minval=0.0, maxval=5.0)
    y, reg = fwd(x, param_slab, reg_const)
    jax.block_until_ready((y, reg))

    assert y.shape == (N_M, N_U) and y.dtype == jnp.float32
    assert reg.shape == ()

    y_exp, reg_exp = ref(x, params, conv_kernel)
    rel_err = float(jnp.linalg.norm(y - y_exp) / jnp.linalg.norm(y_exp))
    assert rel_err < 0.1, f"y mismatch vs reference, rel err = {rel_err}"
    assert float(jnp.abs(reg - reg_exp)) < 1e-3 * (1.0 + float(jnp.abs(reg_exp))), "reg mismatch"

    # --- small batch: exercises the parallel grid axis (2nd TensorCore on v7x) --
    xb = jax.random.uniform(jax.random.fold_in(kx, 1), (2, N_M, N_U), jnp.float32,
                            minval=0.0, maxval=5.0)
    yb, _ = fwd(xb, param_slab, reg_const)
    jax.block_until_ready(yb)
    for i in range(xb.shape[0]):
        y_i, _ = ref(xb[i], params, conv_kernel)
        rel_i = float(jnp.linalg.norm(yb[i] - y_i) / jnp.linalg.norm(y_i))
        assert rel_i < 0.1, f"batched y mismatch at sample {i}, rel err = {rel_i}"

    print("KERNEL_OK")
</pallas_src>

<mosaic_0001>
module attributes {stable_mosaic.version = 11 : i64} {
  func.func @_glocal_k_kernel(%arg0: i32, %arg1: memref<1x16x128xf32, #tpu.memory_space<vmem>>, %arg2: memref<288x128xf32, #tpu.memory_space<vmem>>, %arg3: memref<1x16x128xf32, #tpu.memory_space<vmem>>) attributes {dimension_semantics = [#tpu.dimension_semantics<parallel>], iteration_bounds = array<i64: 1>, scalar_prefetch = 0 : i64, scratch_operands = 0 : i64, tpu.core_type = #tpu.core_type<tc>, window_params = [{transform_indices = @transform_0, window_bounds = array<i64: 1, 16, 128>}, {pipeline_mode = #tpu.pipeline_mode<synchronous>, transform_indices = @transform_1, window_bounds = array<i64: 288, 128>}, {transform_indices = @transform_2, window_bounds = array<i64: 1, 16, 128>}]} {
    %c0 = arith.constant 0 : index
    %c0_0 = arith.constant 0 : index
    %0 = vector.load %arg2[%c0, %c0_0] : memref<288x128xf32, #tpu.memory_space<vmem>>, vector<128x128xf32>
    %c128 = arith.constant 128 : index
    %c0_1 = arith.constant 0 : index
    %1 = vector.load %arg2[%c128, %c0_1] : memref<288x128xf32, #tpu.memory_space<vmem>>, vector<128x128xf32>
    %c256 = arith.constant 256 : index
    %c0_2 = arith.constant 0 : index
    %2 = vector.load %arg2[%c256, %c0_2] : memref<288x128xf32, #tpu.memory_space<vmem>>, vector<16x128xf32>
    %c272 = arith.constant 272 : index
    %c0_3 = arith.constant 0 : index
    %3 = vector.load %arg2[%c272, %c0_3] : memref<288x128xf32, #tpu.memory_space<vmem>>, vector<1x128xf32>
    %c280 = arith.constant 280 : index
    %c0_4 = arith.constant 0 : index
    %4 = vector.load %arg2[%c280, %c0_4] : memref<288x128xf32, #tpu.memory_space<vmem>>, vector<1x128xf32>
    %c0_5 = arith.constant 0 : index
    %c0_6 = arith.constant 0 : index
    %c0_7 = arith.constant 0 : index
    %5 = vector.load %arg1[%c0_5, %c0_6, %c0_7] : memref<1x16x128xf32, #tpu.memory_space<vmem>>, vector<1x16x128xf32>
    %6 = vector.shape_cast %5 : vector<1x16x128xf32> to vector<16x128xf32>
    %cst = arith.constant dense<0.000000e+00> : vector<16x128xf32>
    %7 = tpu.matmul %6, %0, %cst {dimension_numbers = #tpu.dot_dimension_numbers<[1], [0], [0], [1], [0, 0, 1, 1], [], []>} : vector<16x128xf32>, vector<128x128xf32>, vector<16x128xf32> -> vector<16x128xf32>
    %8 = vector.broadcast %3 : vector<1x128xf32> to vector<16x128xf32>
    %9 = arith.addf %7, %8 : vector<16x128xf32>
    %10 = arith.negf %9 : vector<16x128xf32>
    %11 = math.exp %10 : vector<16x128xf32>
    %cst_8 = arith.constant 1.000000e+00 : f32
    %12 = vector.broadcast %cst_8 : f32 to vector<16x128xf32>
    %13 = arith.addf %12, %11 : vector<16x128xf32>
    %14 = arith.divf %12, %13 : vector<16x128xf32>
    %cst_9 = arith.constant dense<0.000000e+00> : vector<16x128xf32>
    %15 = tpu.matmul %14, %1, %cst_9 {dimension_numbers = #tpu.dot_dimension_numbers<[1], [0], [0], [1], [0, 0, 1, 1], [], []>} : vector<16x128xf32>, vector<128x128xf32>, vector<16x128xf32> -> vector<16x128xf32>
    %16 = vector.broadcast %4 : vector<1x128xf32> to vector<16x128xf32>
    %17 = arith.addf %15, %16 : vector<16x128xf32>
    %cst_10 = arith.constant dense<0.000000e+00> : vector<16xf32>
    %18 = vector.multi_reduction <add>, %17, %cst_10 [1] : vector<16x128xf32> to vector<16xf32>
    %19 = vector.shape_cast %18 : vector<16xf32> to vector<16x1xf32>
    %cst_11 = arith.constant 0.0416666679 : f32
    %20 = vector.broadcast %cst_11 : f32 to vector<16x1xf32>
    %21 = arith.mulf %19, %20 : vector<16x1xf32>
    %22 = vector.broadcast %21 : vector<16x1xf32> to vector<16x128xf32>
    %23 = arith.mulf %22, %2 : vector<16x128xf32>
    %cst_12 = arith.constant dense<0.000000e+00> : vector<128xf32>
    %24 = vector.multi_reduction <add>, %23, %cst_12 [0] : vector<16x128xf32> to vector<128xf32>
    %25 = vector.shape_cast %24 : vector<128xf32> to vector<1x128xf32>
    %c1_i32 = arith.constant 1 : i32
    %26 = tpu.dynamic_rotate %6 by %c1_i32 dim 1 : vector<16x128xf32>, i32 -> vector<16x128xf32>
    %c127_i32 = arith.constant 127 : i32
    %27 = tpu.dynamic_rotate %6 by %c127_i32 dim 1 : vector<16x128xf32>, i32 -> vector<16x128xf32>
    %28 = vector.extract_strided_slice %25 {offsets = [0, 0], sizes = [1, 1], strides = [1, 1]} : vector<1x128xf32> to vector<1x1xf32>
    %29 = vector.extract_strided_slice %25 {offsets = [0, 1], sizes = [1, 1], strides = [1, 1]} : vector<1x128xf32> to vector<1x1xf32>
    %30 = vector.extract_strided_slice %25 {offsets = [0, 2], sizes = [1, 1], strides = [1, 1]} : vector<1x128xf32> to vector<1x1xf32>
    %31 = vector.extract_strided_slice %25 {offsets = [0, 3], sizes = [1, 1], strides = [1, 1]} : vector<1x128xf32> to vector<1x1xf32>
    %32 = vector.extract_strided_slice %25 {offsets = [0, 4], sizes = [1, 1], strides = [1, 1]} : vector<1x128xf32> to vector<1x1xf32>
    %33 = vector.extract_strided_slice %25 {offsets = [0, 5], sizes = [1, 1], strides = [1, 1]} : vector<1x128xf32> to vector<1x1xf32>
    %34 = vector.extract_strided_slice %25 {offsets = [0, 6], sizes = [1, 1], strides = [1, 1]} : vector<1x128xf32> to vector<1x1xf32>
    %35 = vector.extract_strided_slice %25 {offsets = [0, 7], sizes = [1, 1], strides = [1, 1]} : vector<1x128xf32> to vector<1x1xf32>
    %36 = vector.extract_strided_slice %25 {offsets = [0, 8], sizes = [1, 1], strides = [1, 1]} : vector<1x128xf32> to vector<1x1xf32>
    %37 = vector.broadcast %28 : vector<1x1xf32> to vector<16x128xf32>
    %38 = arith.mulf %37, %26 : vector<16x128xf32>
    %39 = vector.broadcast %29 : vector<1x1xf32> to vector<16x128xf32>
    %40 = arith.mulf %39, %6 : vector<16x128xf32>
    %41 = arith.addf %38, %40 : vector<16x128xf32>
    %42 = vector.broadcast %30 : vector<1x1xf32> to vector<16x128xf32>
    %43 = arith.mulf %42, %27 : vector<16x128xf32>
    %44 = arith.addf %41, %43 : vector<16x128xf32>
    %45 = vector.broadcast %31 : vector<1x1xf32> to vector<16x128xf32>
    %46 = arith.mulf %45, %26 : vector<16x128xf32>
    %47 = vector.broadcast %32 : vector<1x1xf32> to vector<16x128xf32>
    %48 = arith.mulf %47, %6 : vector<16x128xf32>
    %49 = arith.addf %46, %48 : vector<16x128xf32>
    %50 = vector.broadcast %33 : vector<1x1xf32> to vector<16x128xf32>
    %51 = arith.mulf %50, %27 : vector<16x128xf32>
    %52 = arith.addf %49, %51 : vector<16x128xf32>
    %53 = vector.broadcast %34 : vector<1x1xf32> to vector<16x128xf32>
    %54 = arith.mulf %53, %26 : vector<16x128xf32>
    %55 = vector.broadcast %35 : vector<1x1xf32> to vector<16x128xf32>
    %56 = arith.mulf %55, %6 : vector<16x128xf32>
    %57 = arith.addf %54, %56 : vector<16x128xf32>
    %58 = vector.broadcast %36 : vector<1x1xf32> to vector<16x128xf32>
    %59 = arith.mulf %58, %27 : vector<16x128xf32>
    %60 = arith.addf %57, %59 : vector<16x128xf32>
    %61 = tpu.iota {dimensions = array<i32: 0>} : vector<16x128xi32>
    %c0_i32 = arith.constant 0 : i32
    %62 = vector.broadcast %c0_i32 : i32 to vector<16x128xi32>
    %63 = arith.cmpi eq, %61, %62 : vector<16x128xi32>
    %c1_i32_13 = arith.constant 1 : i32
    %64 = tpu.dynamic_rotate %44 by %c1_i32_13 dim 0 : vector<16x128xf32>, i32 -> vector<16x128xf32>
    %cst_14 = arith.constant 0.000000e+00 : f32
    %65 = vector.broadcast %cst_14 : f32 to vector<16x128xf32>
    %66 = arith.select %63, %65, %64 : vector<16x128xi1>, vector<16x128xf32>
    %c15_i32 = arith.constant 15 : i32
    %67 = vector.broadcast %c15_i32 : i32 to vector<16x128xi32>
    %68 = arith.cmpi eq, %61, %67 : vector<16x128xi32>
    %c15_i32_15 = arith.constant 15 : i32
    %69 = tpu.dynamic_rotate %60 by %c15_i32_15 dim 0 : vector<16x128xf32>, i32 -> vector<16x128xf32>
    %cst_16 = arith.constant 0.000000e+00 : f32
    %70 = vector.broadcast %cst_16 : f32 to vector<16x128xf32>
    %71 = arith.select %68, %70, %69 : vector<16x128xi1>, vector<16x128xf32>
    %72 = arith.addf %66, %52 : vector<16x128xf32>
    %73 = arith.addf %72, %71 : vector<16x128xf32>
    %cst_17 = arith.constant 0.000000e+00 : f32
    %74 = vector.broadcast %cst_17 : f32 to vector<16x128xf32>
    %75 = arith.cmpf oge, %73, %74 : vector<16x128xf32>
    %cst_18 = arith.constant 0.00999999977 : f32
    %76 = vector.broadcast %cst_18 : f32 to vector<16x128xf32>
    %77 = arith.mulf %76, %73 : vector<16x128xf32>
    %78 = arith.select %75, %73, %77 : vector<16x128xi1>, vector<16x128xf32>
    %cst_19 = arith.constant dense<0.000000e+00> : vector<16x128xf32>
    %79 = tpu.matmul %78, %0, %cst_19 {dimension_numbers = #tpu.dot_dimension_numbers<[1], [0], [0], [1], [0, 0, 1, 1], [], []>} : vector<16x128xf32>, vector<128x128xf32>, vector<16x128xf32> -> vector<16x128xf32>
    %80 = vector.broadcast %3 : vector<1x128xf32> to vector<16x128xf32>
    %81 = arith.addf %79, %80 : vector<16x128xf32>
    %82 = arith.negf %81 : vector<16x128xf32>
    %83 = math.exp %82 : vector<16x128xf32>
    %cst_20 = arith.constant 1.000000e+00 : f32
    %84 = vector.broadcast %cst_20 : f32 to vector<16x128xf32>
    %85 = arith.addf %84, %83 : vector<16x128xf32>
    %86 = arith.divf %84, %85 : vector<16x128xf32>
    %cst_21 = arith.constant dense<0.000000e+00> : vector<16x128xf32>
    %87 = tpu.matmul %86, %1, %cst_21 {dimension_numbers = #tpu.dot_dimension_numbers<[1], [0], [0], [1], [0, 0, 1, 1], [], []>} : vector<16x128xf32>, vector<128x128xf32>, vector<16x128xf32> -> vector<16x128xf32>
    %88 = vector.broadcast %4 : vector<1x128xf32> to vector<16x128xf32>
    %89 = arith.addf %87, %88 : vector<16x128xf32>
    %c0_22 = arith.constant 0 : index
    %c0_23 = arith.constant 0 : index
    %c0_24 = arith.constant 0 : index
    %90 = vector.load %arg3[%c0_22, %c0_23, %c0_24] : memref<1x16x128xf32, #tpu.memory_space<vmem>>, vector<1x16x128xf32>
    %91 = vector.shape_cast %90 : vector<1x16x128xf32> to vector<16x128xf32>
    %92 = vector.shape_cast %89 : vector<16x128xf32> to vector<1x16x128xf32>
    tpu.vector_store %arg3[%c0_22, %c0_23, %c0_24], %92 {strides = array<i32>} : memref<1x16x128xf32, #tpu.memory_space<vmem>>, vector<1x16x128xf32>,
    return
  }
  func.func @transform_0(%arg0: i32) -> (i32, i32, i32) {
    %c0_i32 = arith.constant 0 : i32
    %c0_i32_0 = arith.constant 0 : i32
    %c0_i32_1 = arith.constant 0 : i32
    return %arg0, %c0_i32, %c0_i32_0 : i32, i32, i32
  }
  func.func @transform_1(%arg0: i32) -> (i32, i32) {
    %c0_i32 = arith.constant 0 : i32
    %c0_i32_0 = arith.constant 0 : i32
    %c0_i32_1 = arith.constant 0 : i32
    return %c0_i32, %c0_i32_0 : i32, i32
  }
  func.func @transform_2(%arg0: i32) -> (i32, i32, i32) {
    %c0_i32 = arith.constant 0 : i32
    %c0_i32_0 = arith.constant 0 : i32
    %c0_i32_1 = arith.constant 0 : i32
    return %arg0, %c0_i32, %c0_i32_0 : i32, i32, i32
  }
}

</mosaic_0001>

<llo_original>
// kernel: glocal_k_forward.1
$region0: #{glocal_k_forward.1}
  #allocation0 [shape = 'u32[]', space=smem, size = 0x4, offset = 0x4, fixed_abs, tag = 'smem constant byte address 0x4 - core index']
  #allocation1 [shape = 'u32[144,128]{1,0:T(1,128)}', space=vmem, size = 0x12000, scoped, tag = 'internal scratch']
  %s0 = inlined_call_operand.vmem [shape: f32[1,16,128], index: 0, kind: input, shape index: {}]
  %s1 = inlined_call_operand.hbm [shape: f32[288,128], index: 1, kind: input, shape index: {}]
  %s2 = inlined_call_operand.vmem [shape: f32[1,16,128], index: 2, kind: output, shape index: {}]
  %s3 = sld [smem:[#allocation0]]
  $region22: #{glocal_k_forward.1} parent=0
    _
  %s5 = ssub.s32 1, %s3
  %s6 = scalar_select 0, %s5, %s3
  $region1: #{glocal_k_forward.1} parent=0
    #allocation2 [shape = 'u8[147456]{0}', space=vmem, size = 0x24000, scoped, tag = 'input window, operand 1, single buffered']
    #allocation3 [shape = 's32[1]{0}', space=sflag, size = 0x4, scoped, tag = 'scoped memory for glocal_k_forward.1']
    %7 = vsyncpa [#allocation3], 0
    // Predicated region
    $region2: #{glocal_k_forward.1} parent=1 // pred_check
      _
    $region3: #{glocal_k_forward.1} parent=1 // pred_check_branch
      %9 = sbr.rel (0) target = $region5
    $region4: #{glocal_k_forward.1} parent=1 // pred_region
      _
    $region5: #{glocal_k_forward.1} parent=1 // pred_fallthru
      _
    // Predicated region
    $region6: #{glocal_k_forward.1} parent=1 // pred_check
      _
    $region7: #{glocal_k_forward.1} parent=1 // pred_check_branch
      %11 = sbr.rel (0) target = $region9
    $region8: #{glocal_k_forward.1} parent=1 // pred_region
      %s13 = ssub.s32 4608, 4608
      %14 = vsyncadd [#allocation3], %s13
      %s15 = sshll.u32 [#allocation2], 4
      %s16 = int_to_ptr.vmem [resolvable:$true] %s15
      %21 = dma.hbm_to_vmem [thread:$0]  %s1, 4608, %s16, [#allocation3], 128, 128, 8
    $region9: #{glocal_k_forward.1} parent=1 // pred_fallthru
      _
    // Predicated region
    $region10: #{glocal_k_forward.1} parent=1 // pred_check
      _
    $region11: #{glocal_k_forward.1} parent=1 // pred_check_branch
      %23 = sbr.rel (0) target = $region13
    $region12: #{glocal_k_forward.1} parent=1 // pred_region
      %24 = dma.done [#allocation3], 4608
    $region13: #{glocal_k_forward.1} parent=1 // pred_fallthru
      _
    %v25 = vld [vmem:[#allocation2] sm:$0xff]
    %v26 = vld [vmem:[#allocation2 + $0x8] sm:$0xff]
    %v27 = vld [vmem:[#allocation2 + $0x10] sm:$0xff]
    %v28 = vld [vmem:[#allocation2 + $0x18] sm:$0xff]
    %v29 = vld [vmem:[#allocation2 + $0x20] sm:$0xff]
    %v30 = vld [vmem:[#allocation2 + $0x28] sm:$0xff]
    %v31 = vld [vmem:[#allocation2 + $0x30] sm:$0xff]
    %v32 = vld [vmem:[#allocation2 + $0x38] sm:$0xff]
    %v33 = vld [vmem:[#allocation2 + $0x40] sm:$0xff]
    %v34 = vld [vmem:[#allocation2 + $0x48] sm:$0xff]
    %v35 = vld [vmem:[#allocation2 + $0x50] sm:$0xff]
    %v36 = vld [vmem:[#allocation2 + $0x58] sm:$0xff]
    %v37 = vld [vmem:[#allocation2 + $0x60] sm:$0xff]
    %v38 = vld [vmem:[#allocation2 + $0x68] sm:$0xff]
    %v39 = vld [vmem:[#allocation2 + $0x70] sm:$0xff]
    %v40 = vld [vmem:[#allocation2 + $0x78] sm:$0xff]
    %v41 = vld [vmem:[#allocation2 + $0x80] sm:$0xff]
    %v42 = vld [vmem:[#allocation2 + $0x88] sm:$0xff]
    %v43 = vld [vmem:[#allocation2 + $0x90] sm:$0xff]
    %v44 = vld [vmem:[#allocation2 + $0x98] sm:$0xff]
    %v45 = vld [vmem:[#allocation2 + $0xa0] sm:$0xff]
    %v46 = vld [vmem:[#allocation2 + $0xa8] sm:$0xff]
    %v47 = vld [vmem:[#allocation2 + $0xb0] sm:$0xff]
    %v48 = vld [vmem:[#allocation2 + $0xb8] sm:$0xff]
    %v49 = vld [vmem:[#allocation2 + $0xc0] sm:$0xff]
    %v50 = vld [vmem:[#allocation2 + $0xc8] sm:$0xff]
    %v51 = vld [vmem:[#allocation2 + $0xd0] sm:$0xff]
    %v52 = vld [vmem:[#allocation2 + $0xd8] sm:$0xff]
    %v53 = vld [vmem:[#allocation2 + $0xe0] sm:$0xff]
    %v54 = vld [vmem:[#allocation2 + $0xe8] sm:$0xff]
    %v55 = vld [vmem:[#allocation2 + $0xf0] sm:$0xff]
    %v56 = vld [vmem:[#allocation2 + $0xf8] sm:$0xff]
    %v57 = vld [vmem:[#allocation2 + $0x100] sm:$0xff]
    %v58 = vld [vmem:[#allocation2 + $0x108] sm:$0xff]
    %v59 = vld [vmem:[#allocation2 + $0x110] sm:$0x1]
    %v60 = vld [vmem:[#allocation2 + $0x118] sm:$0x1]
    %v61 = vld [vmem:[%s0] sm:$0xff]
    %v62 = vld [vmem:[%s0 + $0x8] sm:$0xff]
    %v63 = vlaneseq
    %v64 = vshrl.u32 %v63, 7
    %v65 = vsub.s32 0, %v64
    %v66 = vrot.slane %v59, %v65
    %67 = vmatprep.subr.mxu0 0.0
    %68 = vmatpush1.msra.mxu0 %v25
    %69 = vmatprep.subr.mxu0 0.0
    %70 = vmatpush1.msra.mxu0 %v26
    %71 = vmatprep.subr.mxu0 0.0
    %72 = vmatpush1.msra.mxu0 %v27
    %73 = vmatprep.subr.mxu0 0.0
    %74 = vmatpush1.msra.mxu0 %v28
    %75 = vmatprep.subr.mxu0 0.0
    %76 = vmatpush1.msra.mxu0 %v29
    %77 = vmatprep.subr.mxu0 0.0
    %78 = vmatpush1.msra.mxu0 %v30
    %79 = vmatprep.subr.mxu0 0.0
    %80 = vmatpush1.msra.mxu0 %v31
    %81 = vmatprep.subr.mxu0 0.0
    %82 = vmatpush1.msra.mxu0 %v32
    %83 = vmatprep.subr.mxu0 0.0
    %84 = vmatpush1.msra.mxu0 %v33
    %85 = vmatprep.subr.mxu0 0.0
    %86 = vmatpush1.msra.mxu0 %v34
    %87 = vmatprep.subr.mxu0 0.0
    %88 = vmatpush1.msra.mxu0 %v35
    %89 = vmatprep.subr.mxu0 0.0
    %90 = vmatpush1.msra.mxu0 %v36
    %91 = vmatprep.subr.mxu0 0.0
    %92 = vmatpush1.msra.mxu0 %v37
    %93 = vmatprep.subr.mxu0 0.0
    %94 = vmatpush1.msra.mxu0 %v38
    %95 = vmatprep.subr.mxu0 0.0
    %96 = vmatpush1.msra.mxu0 %v39
    %97 = vmatprep.subr.mxu0 0.0
    %98 = vmatpush1.msra.mxu0 %v40
    %99 = vmatprep.subr.mxu0 0.0
    %100 = vmatpush1.msra.mxu0 0.0
    %101 = vmatprep.subr.mxu0 0.0
    %102 = vmatpush1.msra.mxu0 0.0
    %103 = vmatprep.subr.mxu0 0.0
    %104 = vmatpush1.msra.mxu0 0.0
    %105 = vmatprep.subr.mxu0 0.0
    %106 = vmatpush1.msra.mxu0 0.0
    %107 = vmatprep.subr.mxu0 0.0
    %108 = vmatpush1.msra.mxu0 0.0
    %109 = vmatprep.subr.mxu0 0.0
    %110 = vmatpush1.msra.mxu0 0.0
    %111 = vmatprep.subr.mxu0 0.0
    %112 = vmatpush1.msra.mxu0 0.0
    %113 = vmatprep.subr.mxu0 0.0
    %114 = vmatpush1.msra.mxu0 0.0
    %115 = vmatprep.subr.mxu0 0.0
    %116 = vmatpush1.msra.mxu0 0.0
    %117 = vmatprep.subr.mxu0 0.0
    %118 = vmatpush1.msra.mxu0 0.0
    %119 = vmatprep.subr.mxu0 0.0
    %120 = vmatpush1.msra.mxu0 0.0
    %121 = vmatprep.subr.mxu0 0.0
    %122 = vmatpush1.msra.mxu0 0.0
    %123 = vmatprep.subr.mxu0 0.0
    %124 = vmatpush1.msra.mxu0 0.0
    %125 = vmatprep.subr.mxu0 0.0
    %126 = vmatpush1.msra.mxu0 0.0
    %127 = vmatprep.subr.mxu0 0.0
    %128 = vmatpush1.msra.mxu0 0.0
    %129 = vmatprep.subr.mxu0 0.0
    %130 = vmatpush1.msra.mxu0 0.0
    %131 = vmatprep.mubr.f32.mxu0 0.0
    %132 = vmatmul.mubr.f32.gmra.mrb[0].mxu0 %v61
    %v133 = vpop.f32.mrb[0].mxu0
    %v134 = vadd.f32 %v66, %v133
    %v135 = vpop.f32.mrb[0].mxu0
    %136 = vmatprep.mubr.f32.mxu0 0.0
    %137 = vmatmul.mubr.f32.gmra.mrb[0].mxu0 %v62
    %v138 = vpop.f32.mrb[0].mxu0
    %v139 = vadd.f32 %v66, %v138
    %v140 = vpop.f32.mrb[0].mxu0
    %141 = vdwg.mxu0
    %v142 = vxor.u32 %v134, 2147483648
    %v143 = vxor.u32 %v139, 2147483648
    %v144 = vmul.f32 %v142, 1.442695
    %v145 = vpow.pop %v144
    %v146 = vmul.f32 %v143, 1.442695
    %v147 = vpow.pop %v146
    %v148 = vadd.f32 %v145, 1.0
    %v149 = vadd.f32 %v147, 1.0
    %v150 = vrcp.pop %v148
    %v151 = vmul.f32 1.0, %v150
    %v152 = vrcp.pop %v149
    %v153 = vmul.f32 1.0, %v152
    %v154 = vlaneseq
    %v155 = vshrl.u32 %v154, 7
    %v156 = vsub.s32 0, %v155
    %v157 = vrot.slane %v60, %v156
    %158 = vmatprep.subr.mxu0 0.0
    %159 = vmatpush1.msra.mxu0 %v41
    %160 = vmatprep.subr.mxu0 0.0
    %161 = vmatpush1.msra.mxu0 %v42
    %162 = vmatprep.subr.mxu0 0.0
    %163 = vmatpush1.msra.mxu0 %v43
    %164 = vmatprep.subr.mxu0 0.0
    %165 = vmatpush1.msra.mxu0 %v44
    %166 = vmatprep.subr.mxu0 0.0
    %167 = vmatpush1.msra.mxu0 %v45
    %168 = vmatprep.subr.mxu0 0.0
    %169 = vmatpush1.msra.mxu0 %v46
    %170 = vmatprep.subr.mxu0 0.0
    %171 = vmatpush1.msra.mxu0 %v47
    %172 = vmatprep.subr.mxu0 0.0
    %173 = vmatpush1.msra.mxu0 %v48
    %174 = vmatprep.subr.mxu0 0.0
    %175 = vmatpush1.msra.mxu0 %v49
    %176 = vmatprep.subr.mxu0 0.0
    %177 = vmatpush1.msra.mxu0 %v50
    %178 = vmatprep.subr.mxu0 0.0
    %179 = vmatpush1.msra.mxu0 %v51
    %180 = vmatprep.subr.mxu0 0.0
    %181 = vmatpush1.msra.mxu0 %v52
    %182 = vmatprep.subr.mxu0 0.0
    %183 = vmatpush1.msra.mxu0 %v53
    %184 = vmatprep.subr.mxu0 0.0
    %185 = vmatpush1.msra.mxu0 %v54
    %186 = vmatprep.subr.mxu0 0.0
    %187 = vmatpush1.msra.mxu0 %v55
    %188 = vmatprep.subr.mxu0 0.0
    %189 = vmatpush1.msra.mxu0 %v56
    %190 = vmatprep.subr.mxu0 0.0
    %191 = vmatpush1.msra.mxu0 0.0
    %192 = vmatprep.subr.mxu0 0.0
    %193 = vmatpush1.msra.mxu0 0.0
    %194 = vmatprep.subr.mxu0 0.0
    %195 = vmatpush1.msra.mxu0 0.0
    %196 = vmatprep.subr.mxu0 0.0
    %197 = vmatpush1.msra.mxu0 0.0
    %198 = vmatprep.subr.mxu0 0.0
    %199 = vmatpush1.msra.mxu0 0.0
    %200 = vmatprep.subr.mxu0 0.0
    %201 = vmatpush1.msra.mxu0 0.0
    %202 = vmatprep.subr.mxu0 0.0
    %203 = vmatpush1.msra.mxu0 0.0
    %204 = vmatprep.subr.mxu0 0.0
    %205 = vmatpush1.msra.mxu0 0.0
    %206 = vmatprep.subr.mxu0 0.0
    %207 = vmatpush1.msra.mxu0 0.0
    %208 = vmatprep.subr.mxu0 0.0
    %209 = vmatpush1.msra.mxu0 0.0
    %210 = vmatprep.subr.mxu0 0.0
    %211 = vmatpush1.msra.mxu0 0.0
    %212 = vmatprep.subr.mxu0 0.0
    %213 = vmatpush1.msra.mxu0 0.0
    %214 = vmatprep.subr.mxu0 0.0
    %215 = vmatpush1.msra.mxu0 0.0
    %216 = vmatprep.subr.mxu0 0.0
    %217 = vmatpush1.msra.mxu0 0.0
    %218 = vmatprep.subr.mxu0 0.0
    %219 = vmatpush1.msra.mxu0 0.0
    %220 = vmatprep.subr.mxu0 0.0
    %221 = vmatpush1.msra.mxu0 0.0
    %222 = vmatprep.mubr.f32.mxu0 0.0
    %223 = vmatmul.mubr.f32.gmra.mrb[0].mxu0 %v151
    %v224 = vpop.f32.mrb[0].mxu0
    %v225 = vadd.f32 %v157, %v224
    %v226 = vpop.f32.mrb[0].mxu0
    %227 = vmatprep.mubr.f32.mxu0 0.0
    %228 = vmatmul.mubr.f32.gmra.mrb[0].mxu0 %v153
    %v229 = vpop.f32.mrb[0].mxu0
    %v230 = vadd.f32 %v157, %v229
    %v231 = vpop.f32.mrb[0].mxu0
    %232 = vdwg.mxu0
    %233 = vadd.xlane.f32.xlu0 %v225
    %v234 = vpop.xlane.xlu0 %233
    %235 = vadd.xlane.f32.xlu0 %v230
    %v236 = vpop.xlane.xlu0 %235
    %v237 = vmul.f32 %v234, 0.041666668
    %v238 = vmul.f32 %v236, 0.041666668
    %v239 = vmul.f32 %v237, %v57
    %v240 = vmul.f32 %v238, %v58
    %v241 = vadd.f32 %v239, %v240
    %v242 = vrot.slane %v241, 4
    %v243 = vadd.f32 %v241, %v242
    %v244 = vrot.slane %v243, 2
    %v245 = vadd.f32 %v243, %v244
    %v246 = vrot.slane %v245, 1
    %v247 = vadd.f32 %v245, %v246
    %248 = vrot.lane.b32.xlu0 %v61, 1
    %v249 = vpop.permute.xlu0 %248
    %250 = vrot.lane.b32.xlu0 %v62, 1
    %v251 = vpop.permute.xlu0 %250
    %252 = vrot.lane.b32.xlu0 %v61, 127
    %v253 = vpop.permute.xlu0 %252
    %254 = vrot.lane.b32.xlu0 %v62, 127
    %v255 = vpop.permute.xlu0 %254
    %257 = vset.pattern.permute.xlu0 0
    %258 = vperm.xlu0 %257, %v247
    %v259 = vpop.permute.xlu0 %258
    %v261 = vmul.f32 %v259, %v249
    %v262 = vmul.f32 %v259, %v251
    %263 = vset.pattern.permute.xlu0 1
    %264 = vperm.xlu0 %263, %v247
    %v265 = vpop.permute.xlu0 %264
    %v267 = vmul.f32 %v265, %v61
    %v268 = vmul.f32 %v265, %v62
    %v269 = vadd.f32 %v261, %v267
    %v270 = vadd.f32 %v262, %v268
    %271 = vset.pattern.permute.xlu0 2
    %272 = vperm.xlu0 %271, %v247
    %v273 = vpop.permute.xlu0 %272
    %v275 = vmul.f32 %v273, %v253
    %v276 = vmul.f32 %v273, %v255
    %v277 = vadd.f32 %v269, %v275
    %v278 = vadd.f32 %v270, %v276
    %279 = vset.pattern.permute.xlu0 3
    %280 = vperm.xlu0 %279, %v247
    %v281 = vpop.permute.xlu0 %280
    %v283 = vmul.f32 %v281, %v249
    %v284 = vmul.f32 %v281, %v251
    %285 = vset.pattern.permute.xlu0 4
    %286 = vperm.xlu0 %285, %v247
    %v287 = vpop.permute.xlu0 %286
    %v289 = vmul.f32 %v287, %v61
    %v290 = vmul.f32 %v287, %v62
    %v291 = vadd.f32 %v283, %v289
    %v292 = vadd.f32 %v284, %v290
    %293 = vset.pattern.permute.xlu0 5
    %294 = vperm.xlu0 %293, %v247
    %v295 = vpop.permute.xlu0 %294
    %v297 = vmul.f32 %v295, %v253
    %v298 = vmul.f32 %v295, %v255
    %v299 = vadd.f32 %v291, %v297
    %v300 = vadd.f32 %v292, %v298
    %301 = vset.pattern.permute.xlu0 6
    %302 = vperm.xlu0 %301, %v247
    %v303 = vpop.permute.xlu0 %302
    %v305 = vmul.f32 %v303, %v249
    %v306 = vmul.f32 %v303, %v251
    %307 = vset.pattern.permute.xlu0 7
    %308 = vperm.xlu0 %307, %v247
    %v309 = vpop.permute.xlu0 %308
    %v311 = vmul.f32 %v309, %v61
    %v312 = vmul.f32 %v309, %v62
    %v313 = vadd.f32 %v305, %v311
    %v314 = vadd.f32 %v306, %v312
    %315 = vset.pattern.permute.xlu0 8
    %316 = vperm.xlu0 %315, %v247
    %v317 = vpop.permute.xlu0 %316
    %v319 = vmul.f32 %v317, %v253
    %v320 = vmul.f32 %v317, %v255
    %v321 = vadd.f32 %v313, %v319
    %v322 = vadd.f32 %v314, %v320
    %v323 = vlaneseq
    %v324 = vshrl.u32 %v323, 7
    %v325 = vadd.s32 %v324, 8
    %vm326 = vcmp.eq.s32.totalorder %v324, 0
    %vm327 = vcmp.eq.s32.totalorder %v325, 0
    %v328 = vrot.slane %v277, 7
    %v329 = vrot.slane %v278, 7
    %vm330 = vcmp.lt.s32.totalorder %v324, 1
    %v331 = vsel %vm330, %v328, %v329
    %v332 = vsel %vm330, %v329, %v328
    %v333 = vsel %vm326, 0.0, %v332
    %v334 = vsel %vm327, 0.0, %v331
    %vm335 = vcmp.eq.s32.totalorder %v324, 15
    %vm336 = vcmp.eq.s32.totalorder %v325, 15
    %v337 = vrot.slane %v321, 1
    %v338 = vrot.slane %v322, 1
    %vm339 = vcmp.lt.s32.totalorder %v324, 7
    %v340 = vsel %vm339, %v337, %v338
    %v341 = vsel %vm339, %v338, %v337
    %v342 = vsel %vm335, 0.0, %v340
    %v343 = vsel %vm336, 0.0, %v341
    %v344 = vadd.f32 %v333, %v299
    %v345 = vadd.f32 %v334, %v300
    %v346 = vadd.f32 %v344, %v342
    %v347 = vadd.f32 %v345, %v343
    %vm348 = vcmp.ge.f32.partialorder %v346, 0.0
    %vm349 = vcmp.ge.f32.partialorder %v347, 0.0
    %v350 = vmul.f32 %v346, 0.01
    %v351 = vmul.f32 %v347, 0.01
    %v352 = vsel %vm348, %v346, %v350
    %v353 = vsel %vm349, %v347, %v351
    %354 = vmatprep.subr.mxu0 0.0
    %355 = vmatpush1.msra.mxu0 %v25
    %356 = vmatprep.subr.mxu0 0.0
    %357 = vmatpush1.msra.mxu0 %v26
    %358 = vmatprep.subr.mxu0 0.0
    %359 = vmatpush1.msra.mxu0 %v27
    %360 = vmatprep.subr.mxu0 0.0
    %361 = vmatpush1.msra.mxu0 %v28
    %362 = vmatprep.subr.mxu0 0.0
    %363 = vmatpush1.msra.mxu0 %v29
    %364 = vmatprep.subr.mxu0 0.0
    %365 = vmatpush1.msra.mxu0 %v30
    %366 = vmatprep.subr.mxu0 0.0
    %367 = vmatpush1.msra.mxu0 %v31
    %368 = vmatprep.subr.mxu0 0.0
    %369 = vmatpush1.msra.mxu0 %v32
    %370 = vmatprep.subr.mxu0 0.0
    %371 = vmatpush1.msra.mxu0 %v33
    %372 = vmatprep.subr.mxu0 0.0
    %373 = vmatpush1.msra.mxu0 %v34
    %374 = vmatprep.subr.mxu0 0.0
    %375 = vmatpush1.msra.mxu0 %v35
    %376 = vmatprep.subr.mxu0 0.0
    %377 = vmatpush1.msra.mxu0 %v36
    %378 = vmatprep.subr.mxu0 0.0
    %379 = vmatpush1.msra.mxu0 %v37
    %380 = vmatprep.subr.mxu0 0.0
    %381 = vmatpush1.msra.mxu0 %v38
    %382 = vmatprep.subr.mxu0 0.0
    %383 = vmatpush1.msra.mxu0 %v39
    %384 = vmatprep.subr.mxu0 0.0
    %385 = vmatpush1.msra.mxu0 %v40
    %386 = vmatprep.subr.mxu0 0.0
    %387 = vmatpush1.msra.mxu0 0.0
    %388 = vmatprep.subr.mxu0 0.0
    %389 = vmatpush1.msra.mxu0 0.0
    %390 = vmatprep.subr.mxu0 0.0
    %391 = vmatpush1.msra.mxu0 0.0
    %392 = vmatprep.subr.mxu0 0.0
    %393 = vmatpush1.msra.mxu0 0.0
    %394 = vmatprep.subr.mxu0 0.0
    %395 = vmatpush1.msra.mxu0 0.0
    %396 = vmatprep.subr.mxu0 0.0
    %397 = vmatpush1.msra.mxu0 0.0
    %398 = vmatprep.subr.mxu0 0.0
    %399 = vmatpush1.msra.mxu0 0.0
    %400 = vmatprep.subr.mxu0 0.0
    %401 = vmatpush1.msra.mxu0 0.0
    %402 = vmatprep.subr.mxu0 0.0
    %403 = vmatpush1.msra.mxu0 0.0
    %404 = vmatprep.subr.mxu0 0.0
    %405 = vmatpush1.msra.mxu0 0.0
    %406 = vmatprep.subr.mxu0 0.0
    %407 = vmatpush1.msra.mxu0 0.0
    %408 = vmatprep.subr.mxu0 0.0
    %409 = vmatpush1.msra.mxu0 0.0
    %410 = vmatprep.subr.mxu0 0.0
    %411 = vmatpush1.msra.mxu0 0.0
    %412 = vmatprep.subr.mxu0 0.0
    %413 = vmatpush1.msra.mxu0 0.0
    %414 = vmatprep.subr.mxu0 0.0
    %415 = vmatpush1.msra.mxu0 0.0
    %416 = vmatprep.subr.mxu0 0.0
    %417 = vmatpush1.msra.mxu0 0.0
    %418 = vmatprep.mubr.f32.mxu0 0.0
    %419 = vmatmul.mubr.f32.gmra.mrb[0].mxu0 %v352
    %v420 = vpop.f32.mrb[0].mxu0
    %v421 = vadd.f32 %v66, %v420
    %v422 = vpop.f32.mrb[0].mxu0
    %423 = vmatprep.mubr.f32.mxu0 0.0
    %424 = vmatmul.mubr.f32.gmra.mrb[0].mxu0 %v353
    %v425 = vpop.f32.mrb[0].mxu0
    %v426 = vadd.f32 %v66, %v425
    %v427 = vpop.f32.mrb[0].mxu0
    %428 = vdwg.mxu0
    %v429 = vxor.u32 %v421, 2147483648
    %v430 = vxor.u32 %v426, 2147483648
    %v431 = vmul.f32 %v429, 1.442695
    %v432 = vpow.pop %v431
    %v433 = vmul.f32 %v430, 1.442695
    %v434 = vpow.pop %v433
    %v435 = vadd.f32 %v432, 1.0
    %v436 = vadd.f32 %v434, 1.0
    %v437 = vrcp.pop %v435
    %v438 = vmul.f32 1.0, %v437
    %v439 = vrcp.pop %v436
    %v440 = vmul.f32 1.0, %v439
    %441 = vmatprep.subr.mxu0 0.0
    %442 = vmatpush1.msra.mxu0 %v41
    %443 = vmatprep.subr.mxu0 0.0
    %444 = vmatpush1.msra.mxu0 %v42
    %445 = vmatprep.subr.mxu0 0.0
    %446 = vmatpush1.msra.mxu0 %v43
    %447 = vmatprep.subr.mxu0 0.0
    %448 = vmatpush1.msra.mxu0 %v44
    %449 = vmatprep.subr.mxu0 0.0
    %450 = vmatpush1.msra.mxu0 %v45
    %451 = vmatprep.subr.mxu0 0.0
    %452 = vmatpush1.msra.mxu0 %v46
    %453 = vmatprep.subr.mxu0 0.0
    %454 = vmatpush1.msra.mxu0 %v47
    %455 = vmatprep.subr.mxu0 0.0
    %456 = vmatpush1.msra.mxu0 %v48
    %457 = vmatprep.subr.mxu0 0.0
    %458 = vmatpush1.msra.mxu0 %v49
    %459 = vmatprep.subr.mxu0 0.0
    %460 = vmatpush1.msra.mxu0 %v50
    %461 = vmatprep.subr.mxu0 0.0
    %462 = vmatpush1.msra.mxu0 %v51
    %463 = vmatprep.subr.mxu0 0.0
    %464 = vmatpush1.msra.mxu0 %v52
    %465 = vmatprep.subr.mxu0 0.0
    %466 = vmatpush1.msra.mxu0 %v53
    %467 = vmatprep.subr.mxu0 0.0
    %468 = vmatpush1.msra.mxu0 %v54
    %469 = vmatprep.subr.mxu0 0.0
    %470 = vmatpush1.msra.mxu0 %v55
    %471 = vmatprep.subr.mxu0 0.0
    %472 = vmatpush1.msra.mxu0 %v56
    %473 = vmatprep.subr.mxu0 0.0
    %474 = vmatpush1.msra.mxu0 0.0
    %475 = vmatprep.subr.mxu0 0.0
    %476 = vmatpush1.msra.mxu0 0.0
    %477 = vmatprep.subr.mxu0 0.0
    %478 = vmatpush1.msra.mxu0 0.0
    %479 = vmatprep.subr.mxu0 0.0
    %480 = vmatpush1.msra.mxu0 0.0
    %481 = vmatprep.subr.mxu0 0.0
    %482 = vmatpush1.msra.mxu0 0.0
    %483 = vmatprep.subr.mxu0 0.0
    %484 = vmatpush1.msra.mxu0 0.0
    %485 = vmatprep.subr.mxu0 0.0
    %486 = vmatpush1.msra.mxu0 0.0
    %487 = vmatprep.subr.mxu0 0.0
    %488 = vmatpush1.msra.mxu0 0.0
    %489 = vmatprep.subr.mxu0 0.0
    %490 = vmatpush1.msra.mxu0 0.0
    %491 = vmatprep.subr.mxu0 0.0
    %492 = vmatpush1.msra.mxu0 0.0
    %493 = vmatprep.subr.mxu0 0.0
    %494 = vmatpush1.msra.mxu0 0.0
    %495 = vmatprep.subr.mxu0 0.0
    %496 = vmatpush1.msra.mxu0 0.0
    %497 = vmatprep.subr.mxu0 0.0
    %498 = vmatpush1.msra.mxu0 0.0
    %499 = vmatprep.subr.mxu0 0.0
    %500 = vmatpush1.msra.mxu0 0.0
    %501 = vmatprep.subr.mxu0 0.0
    %502 = vmatpush1.msra.mxu0 0.0
    %503 = vmatprep.subr.mxu0 0.0
    %504 = vmatpush1.msra.mxu0 0.0
    %505 = vmatprep.mubr.f32.mxu0 0.0
    %506 = vmatmul.mubr.f32.gmra.mrb[0].mxu0 %v438
    %v507 = vpop.f32.mrb[0].mxu0
    %v508 = vadd.f32 %v157, %v507
    %v509 = vpop.f32.mrb[0].mxu0
    %510 = vmatprep.mubr.f32.mxu0 0.0
    %511 = vmatmul.mubr.f32.gmra.mrb[0].mxu0 %v440
    %v512 = vpop.f32.mrb[0].mxu0
    %v513 = vadd.f32 %v157, %v512
    %v514 = vpop.f32.mrb[0].mxu0
    %515 = vdwg.mxu0
    %516 = vst [vmem:[%s2] sm:$0xff] %v508
    %517 = vst [vmem:[%s2 + $0x8] sm:$0xff] %v513
    // Predicated region
    $region14: #{glocal_k_forward.1} parent=1 // pred_check
      _
    $region15: #{glocal_k_forward.1} parent=1 // pred_check_branch
      %519 = sbr.rel (0) target = $region17
    $region16: #{glocal_k_forward.1} parent=1 // pred_region
      _
    $region17: #{glocal_k_forward.1} parent=1 // pred_fallthru
      _
    // Predicated region
    $region18: #{glocal_k_forward.1} parent=1 // pred_check
      _
    $region19: #{glocal_k_forward.1} parent=1 // pred_check_branch
      %521 = sbr.rel (0) target = $region21
    $region20: #{glocal_k_forward.1} parent=1 // pred_region
      _
    $region21: #{glocal_k_forward.1} parent=1 // pred_fallthru
      _
    %522 = vsyncpa [#allocation3], 1

</llo_original>
